<compile_context>
chip_gen: v6e
topology: v6e:2x2x1
jax: 0.10.0
libtpu: 0.0.40
codegen_flags: <defaults>
</compile_context>

<pallas_src>
import jax
import jax.numpy as jnp
import numpy as np
from jax.experimental import pallas as pl
from jax.experimental.pallas import tpu as pltpu


def _round_up(x, m):
    return ((x + m - 1) // m) * m


def _make_kernel(res_row, c_out):
    """Fused block: conv1(+bias,relu) -> conv2(+bias,relu) -> +residual -> relu."""

    def kernel(x_ref, w1_ref, b1_ref, w2_ref, b2_ref, o_ref):
        # x arrives as bf16 (halves HBM traffic); upcast once and keep every op in f32
        # (safe on v5e's f32-only VPU; contraction dims stay in the 8-aligned f32 regime).
        xf = x_ref[...].astype(jnp.float32)                                   # (RCp, TN)
        # conv1 at all K needed timesteps (all taps fused into one matmul) + bias -> relu
        h1 = jnp.maximum(
            jnp.dot(w1_ref[...], xf, preferred_element_type=jnp.float32) + b1_ref[...],
            0.0)
        # conv2 at the last timestep (all taps fused into one matmul) + bias -> relu
        h2 = jnp.maximum(
            jnp.dot(w2_ref[...], h1, preferred_element_type=jnp.float32) + b2_ref[...],
            0.0)
        # residual = x at the last timestep, final relu
        res = xf[res_row:res_row + c_out, :]
        o_ref[...] = jnp.maximum(h2 + res, 0.0)

    return kernel


def build_fused_params(w1, b1, w2, b2, *, K, dilation, T):
    """Host-side (numpy) construction of the fused block-sparse weights.

    Hoisted out of the per-step path: weights are static between steps, so the K*K
    scatter loop is done once here instead of as many tiny XLA kernels per forward."""
    w1m = np.asarray(w1)[:, :, :, 0, 0].astype(np.float32)      # [Cout, Cin, K]
    w2m = np.asarray(w2)[:, :, :, 0, 0].astype(np.float32)
    b1f = np.asarray(b1).astype(np.float32)
    b2f = np.asarray(b2).astype(np.float32)
    Cout, Cin, _ = w1m.shape
    assert Cin == Cout, "module's residual add requires C_in == C_out"

    Rwin = 2 * (K - 1) * dilation + 1       # receptive field of the last output timestep
    RC = Rwin * Cin
    RCp = _round_up(RC, 8)                  # contraction dim of matmul #1 -> multiple of 8
    Rw = K * Cout
    Rwp = _round_up(Rw, 8)                  # contraction dim of matmul #2 -> multiple of 8

    W1 = np.zeros((Rwp, RCp), np.float32)
    B1 = np.zeros((Rwp, 1), np.float32)
    W2 = np.zeros((Cout, Rwp), np.float32)
    B2 = b2f.reshape(Cout, 1).copy()

    for j in range(K):
        # h1 row-block j == conv1 output at real time (T-1) - j*dilation.
        if (T - 1) - j * dilation < 0:
            continue                         # conv2 sees causal zero padding -> rows stay 0
        t1 = (Rwin - 1) - j * dilation       # position inside the receptive-field window
        for k in range(K):
            idx = t1 - (K - 1 - k) * dilation          # always >= 0 within the window
            W1[j * Cout:(j + 1) * Cout, idx * Cin:(idx + 1) * Cin] = w1m[:, :, k]
        B1[j * Cout:(j + 1) * Cout, 0] = b1f
        W2[:, j * Cout:(j + 1) * Cout] = w2m[:, :, K - 1 - j]

    return dict(W1=jnp.asarray(W1), B1=jnp.asarray(B1),
                W2=jnp.asarray(W2), B2=jnp.asarray(B2),
                Rwin=Rwin, RC=RC, RCp=RCp, Cin=Cin, Cout=Cout)


def temporal_block3d_forward(x, params, *, K, dilation, stride=1, tn_max=8192):
    """x: [B, T, C, H, W] (PyTorch forward convention). Returns [B, C_out, H, W]."""
    assert stride == 1, "stride=1 only (standard TCN; see TODO above)"
    B, T, C, H, W = x.shape
    Rwin, RC, RCp = params["Rwin"], params["RC"], params["RCp"]
    Cout = params["Cout"]
    assert C == params["Cin"], "input channels must match the fused weights"
    N = B * H * W

    # --- receptive-field window only, sliced BEFORE any transpose -----------------------
    if T >= Rwin:
        xw = jax.lax.slice_in_dim(x, T - Rwin, T, axis=1)         # [B, Rwin, C, H, W]
    else:                                       # causal zero padding at the front
        xw = jnp.pad(x, ((0, 0), (Rwin - T, 0), (0, 0), (0, 0), (0, 0)))
    # One materializing copy: cast -> transpose -> reshape into a lane-dense bf16 slab.
    x_flat = jnp.transpose(xw.astype(jnp.bfloat16), (1, 2, 0, 3, 4)).reshape(RC, N)
    if RCp != RC:
        # Round the contraction dim up to a multiple of 8; W1's extra columns are zero, so
        # the padded rows never contribute.
        x_flat = jnp.pad(x_flat, ((0, RCp - RC), (0, 0)))

    # --- lane tiling: big tiles, but >= 2 grid steps when possible (v7x megacore) -------
    TN = max(128, min(tn_max, _round_up((N + 1) // 2, 128)))
    ntiles = pl.cdiv(N, TN)

    W1, B1, W2, B2 = params["W1"], params["B1"], params["W2"], params["B2"]
    Rwp = W1.shape[0]
    kernel = _make_kernel((Rwin - 1) * C, Cout)

    cost = pl.CostEstimate(
        flops=int(2 * (Rwp * RCp + Cout * Rwp) * N),
        transcendentals=0,
        bytes_accessed=int(RCp * N * 2 + Cout * N * 4
                           + W1.size * 4 + W2.size * 4 + Rwp * 4 + Cout * 4),
    )

    out = pl.pallas_call(
        kernel,
        out_shape=jax.ShapeDtypeStruct((Cout, N), jnp.float32),
        grid_spec=pltpu.PrefetchScalarGridSpec(
            num_scalar_prefetch=0,
            grid=(ntiles,),
            in_specs=[
                pl.BlockSpec((RCp, TN), lambda i: (0, i)),     # bf16 x-window tile
                pl.BlockSpec((Rwp, RCp), lambda i: (0, 0)),    # fused conv1 weights
                pl.BlockSpec((Rwp, 1), lambda i: (0, 0)),      # conv1 bias column
                pl.BlockSpec((Cout, Rwp), lambda i: (0, 0)),   # fused conv2 weights
                pl.BlockSpec((Cout, 1), lambda i: (0, 0)),     # conv2 bias column
            ],
            out_specs=pl.BlockSpec((Cout, TN), lambda i: (0, i)),
        ),
        compiler_params=pltpu.CompilerParams(
            dimension_semantics=("parallel",),
        ),
        cost_estimate=cost,
    )(x_flat, W1, B1, W2, B2)

    return jnp.transpose(out.reshape(Cout, B, H, W), (1, 0, 2, 3))


def ref_forward(x, w1, b1, w2, b2, K, dil):
    """Pure-JAX reference mirroring the PyTorch forward (eval mode, stride=1)."""
    B, T, C, H, W = x.shape
    P = (K - 1) * dil
    xc = jnp.transpose(x, (0, 2, 1, 3, 4))       # NCDHW

    def causal_conv(inp, w, b):
        pad = jnp.pad(inp, ((0, 0), (0, 0), (P, P), (0, 0), (0, 0)))
        outs = []
        for t in range(T):                       # conv + chomp keeps first T positions
            acc = b[None, :, None, None]
            for k in range(K):
                acc = acc + jnp.einsum(
                    "oc,bchw->bohw", w[:, :, k, 0, 0], pad[:, :, t + k * dil]
                )
            outs.append(acc)
        return jnp.stack(outs, axis=2)

    out1 = jnp.maximum(causal_conv(xc, w1, b1), 0.0)
    out2 = jnp.maximum(causal_conv(out1, w2, b2), 0.0)
    out = jnp.maximum(out2 + xc, 0.0)
    return out[:, :, -1]


if __name__ == "__main__":
    B, T, C, H, W = 2, 8, 4, 16, 16
    K, dilation, stride, dropout = 3, 1, 1, 0.1

    key = jax.random.PRNGKey(0)
    k1, k2, k3, k4, k5 = jax.random.split(key, 5)
    x = jax.random.normal(k1, (B, T, C, H, W), jnp.float32)
    # Conv3d weights: [C_out, C_in, K, 1, 1]; biases: [C_out]
    w1 = jax.random.normal(k2, (C, C, K, 1, 1), jnp.float32) * 0.1
    b1 = jax.random.normal(k3, (C,), jnp.float32) * 0.1
    w2 = jax.random.normal(k4, (C, C, K, 1, 1), jnp.float32) * 0.1
    b2 = jax.random.normal(k5, (C,), jnp.float32) * 0.1

    params = build_fused_params(w1, b1, w2, b2, K=K, dilation=dilation, T=T)
    out = temporal_block3d_forward(x, params, K=K, dilation=dilation, stride=stride)
    out = jax.block_until_ready(out)
    assert out.shape == (B, C, H, W)

    ref = ref_forward(x, w1, b1, w2, b2, K, dilation)
    # x (and hence the residual) is streamed to the kernel in bf16, so compare against the
    # f32 reference with a bf16-appropriate tolerance.
    np.testing.assert_allclose(np.asarray(out), np.asarray(ref), rtol=2e-2, atol=2e-2)

    print("KERNEL_OK")
</pallas_src>

<mosaic_0001>
module attributes {stable_mosaic.version = 11 : i64} {
  func.func @kernel(%arg0: i32, %arg1: memref<24x256xbf16, #tpu.memory_space<vmem>>, %arg2: memref<16x24xf32, #tpu.memory_space<vmem>>, %arg3: memref<16x1xf32, #tpu.memory_space<vmem>>, %arg4: memref<4x16xf32, #tpu.memory_space<vmem>>, %arg5: memref<4x1xf32, #tpu.memory_space<vmem>>, %arg6: memref<4x256xf32, #tpu.memory_space<vmem>>) attributes {dimension_semantics = [#tpu.dimension_semantics<parallel>], iteration_bounds = array<i64: 2>, scalar_prefetch = 0 : i64, scratch_operands = 0 : i64, tpu.core_type = #tpu.core_type<tc>, window_params = [{transform_indices = @transform_0, window_bounds = array<i64: 24, 256>}, {pipeline_mode = #tpu.pipeline_mode<synchronous>, transform_indices = @transform_1, window_bounds = array<i64: 16, 24>}, {pipeline_mode = #tpu.pipeline_mode<synchronous>, transform_indices = @transform_2, window_bounds = array<i64: 16, 1>}, {pipeline_mode = #tpu.pipeline_mode<synchronous>, transform_indices = @transform_3, window_bounds = array<i64: 4, 16>}, {pipeline_mode = #tpu.pipeline_mode<synchronous>, transform_indices = @transform_4, window_bounds = array<i64: 4, 1>}, {transform_indices = @transform_5, window_bounds = array<i64: 4, 256>}]} {
    %c0 = arith.constant 0 : index
    %c0_0 = arith.constant 0 : index
    %0 = vector.load %arg1[%c0, %c0_0] : memref<24x256xbf16, #tpu.memory_space<vmem>>, vector<24x256xbf16>
    %1 = arith.extf %0 : vector<24x256xbf16> to vector<24x256xf32>
    %c0_1 = arith.constant 0 : index
    %c0_2 = arith.constant 0 : index
    %2 = vector.load %arg2[%c0_1, %c0_2] : memref<16x24xf32, #tpu.memory_space<vmem>>, vector<16x24xf32>
    %cst = arith.constant dense<0.000000e+00> : vector<16x256xf32>
    %3 = tpu.matmul %2, %1, %cst {dimension_numbers = #tpu.dot_dimension_numbers<[1], [0], [0], [1], [0, 0, 1, 1], [], []>} : vector<16x24xf32>, vector<24x256xf32>, vector<16x256xf32> -> vector<16x256xf32>
    %c0_3 = arith.constant 0 : index
    %c0_4 = arith.constant 0 : index
    %4 = vector.load %arg3[%c0_3, %c0_4] : memref<16x1xf32, #tpu.memory_space<vmem>>, vector<16x1xf32>
    %5 = vector.broadcast %4 : vector<16x1xf32> to vector<16x256xf32>
    %6 = arith.addf %3, %5 : vector<16x256xf32>
    %cst_5 = arith.constant 0.000000e+00 : f32
    %7 = vector.broadcast %cst_5 : f32 to vector<16x256xf32>
    %8 = arith.maximumf %6, %7 : vector<16x256xf32>
    %c0_6 = arith.constant 0 : index
    %c0_7 = arith.constant 0 : index
    %9 = vector.load %arg4[%c0_6, %c0_7] : memref<4x16xf32, #tpu.memory_space<vmem>>, vector<4x16xf32>
    %cst_8 = arith.constant dense<0.000000e+00> : vector<4x256xf32>
    %10 = tpu.matmul %9, %8, %cst_8 {dimension_numbers = #tpu.dot_dimension_numbers<[1], [0], [0], [1], [0, 0, 1, 1], [], []>} : vector<4x16xf32>, vector<16x256xf32>, vector<4x256xf32> -> vector<4x256xf32>
    %c0_9 = arith.constant 0 : index
    %c0_10 = arith.constant 0 : index
    %11 = vector.load %arg5[%c0_9, %c0_10] : memref<4x1xf32, #tpu.memory_space<vmem>>, vector<4x1xf32>
    %12 = vector.broadcast %11 : vector<4x1xf32> to vector<4x256xf32>
    %13 = arith.addf %10, %12 : vector<4x256xf32>
    %cst_11 = arith.constant 0.000000e+00 : f32
    %14 = vector.broadcast %cst_11 : f32 to vector<4x256xf32>
    %15 = arith.maximumf %13, %14 : vector<4x256xf32>
    %16 = vector.extract_strided_slice %1 {offsets = [16, 0], sizes = [4, 256], strides = [1, 1]} : vector<24x256xf32> to vector<4x256xf32>
    %17 = arith.addf %15, %16 : vector<4x256xf32>
    %cst_12 = arith.constant 0.000000e+00 : f32
    %18 = vector.broadcast %cst_12 : f32 to vector<4x256xf32>
    %19 = arith.maximumf %17, %18 : vector<4x256xf32>
    %c0_13 = arith.constant 0 : index
    %c0_14 = arith.constant 0 : index
    %20 = vector.load %arg6[%c0_13, %c0_14] : memref<4x256xf32, #tpu.memory_space<vmem>>, vector<4x256xf32>
    tpu.vector_store %arg6[%c0_13, %c0_14], %19 {strides = array<i32>} : memref<4x256xf32, #tpu.memory_space<vmem>>, vector<4x256xf32>,
    return
  }
  func.func @transform_0(%arg0: i32) -> (i32, i32) {
    %c0_i32 = arith.constant 0 : i32
    %c0_i32_0 = arith.constant 0 : i32
    return %c0_i32, %arg0 : i32, i32
  }
  func.func @transform_1(%arg0: i32) -> (i32, i32) {
    %c0_i32 = arith.constant 0 : i32
    %c0_i32_0 = arith.constant 0 : i32
    %c0_i32_1 = arith.constant 0 : i32
    return %c0_i32, %c0_i32_0 : i32, i32
  }
  func.func @transform_2(%arg0: i32) -> (i32, i32) {
    %c0_i32 = arith.constant 0 : i32
    %c0_i32_0 = arith.constant 0 : i32
    %c0_i32_1 = arith.constant 0 : i32
    return %c0_i32, %c0_i32_0 : i32, i32
  }
  func.func @transform_3(%arg0: i32) -> (i32, i32) {
    %c0_i32 = arith.constant 0 : i32
    %c0_i32_0 = arith.constant 0 : i32
    %c0_i32_1 = arith.constant 0 : i32
    return %c0_i32, %c0_i32_0 : i32, i32
  }
  func.func @transform_4(%arg0: i32) -> (i32, i32) {
    %c0_i32 = arith.constant 0 : i32
    %c0_i32_0 = arith.constant 0 : i32
    %c0_i32_1 = arith.constant 0 : i32
    return %c0_i32, %c0_i32_0 : i32, i32
  }
  func.func @transform_5(%arg0: i32) -> (i32, i32) {
    %c0_i32 = arith.constant 0 : i32
    %c0_i32_0 = arith.constant 0 : i32
    return %c0_i32, %arg0 : i32, i32
  }
}

</mosaic_0001>

<llo_original>
// kernel: tpu_custom_call.1
$region0: #{tpu_custom_call.1}
  #allocation0 [shape = 'u32[]', space=smem, size = 0x4, offset = 0x4, fixed_abs, tag = 'smem constant byte address 0x4 - core index']
  #allocation1 [shape = 'u32[144,128]{1,0:T(1,128)}', space=vmem, size = 0x12000, scoped, tag = 'internal scratch']
  %s0 = inlined_call_operand.hbm [shape: bf16[24,512], index: 0, kind: input, shape index: {}]
  %s1 = inlined_call_operand.vmem [shape: f32[16,24], index: 1, kind: input, shape index: {}]
  %s2 = inlined_call_operand.vmem [shape: f32[16,1], index: 2, kind: input, shape index: {}]
  %s3 = inlined_call_operand.vmem [shape: f32[4,16], index: 3, kind: input, shape index: {}]
  %s4 = inlined_call_operand.vmem [shape: f32[4,1], index: 4, kind: input, shape index: {}]
  %s5 = inlined_call_operand.hbm [shape: f32[4,512], index: 5, kind: output, shape index: {}]
  %s6 = sld [smem:[#allocation0]]
  $region57: #{tpu_custom_call.1} parent=0
    _
  %s8 = ssub.s32 1, %s6
  %s9 = scalar_select 0, %s8, %s6
  $region1: #{tpu_custom_call.1} parent=0
    #allocation2 [shape = 'u8[24576]{0}', space=vmem, size = 0x6000, scoped, tag = 'input window, operand 0']
    #allocation3 [shape = 's32[2]{0}', space=sflag, size = 0x8, scoped, tag = 'scoped memory for tpu_custom_call.1']
    #allocation4 [shape = 's32[2]{0}', space=sflag, size = 0x8, scoped, tag = 'scoped memory for tpu_custom_call.1']
    #allocation5 [shape = 'u8[8192]{0}', space=vmem, size = 0x2000, scoped, tag = 'output window, operand 0']
    %10 = vsyncpa [#allocation3], 0
    %s11 = scalar_lea.sflag [#allocation3], 1
    %12 = vsyncpa %s11, 0
    %13 = vsyncpa [#allocation4], 0
    %s14 = scalar_lea.sflag [#allocation4], 1
    %15 = vsyncpa %s14, 0
    loop: start=0, step=1, limit=4
    $region2: #{tpu_custom_call.1} parent=1 // loop_pre_header
      _
    $region3: #{tpu_custom_call.1} parent=1 // loop_header
      %s17 = sphi 0, %s21
      %p18 = scmp.ge.s32.totalorder %s17, 4
      %s27 = sphi 0, %s29
      %s30 = sphi 0, %s27
      %s31 = sphi 0, %s30
      %s47 = sphi 0, %s31
      %s51 = sphi 0, %s51
      %s53 = sphi 0, %s51
      %s54 = sphi 0, %s53
      %s68 = sphi 0, %s54
      %s72 = sphi 0, %s72
      %s74 = sphi 0, %s72
      %s75 = sphi 0, %s74
      %s89 = sphi 0, %s75
      %s93 = sphi 0, %s93
      %s95 = sphi 0, %s93
      %s96 = sphi 0, %s95
      %s110 = sphi 0, %s96
      %s114 = sphi 0, %s114
      %s116 = sphi 0, %s114
      %s117 = sphi 0, %s116
      %s131 = sphi 0, %s117
      %s137 = sphi 0, %s139
      %s140 = sphi 0, %s137
      %s141 = sphi 0, %s140
      %s157 = sphi 0, %s141
    $region4: #{tpu_custom_call.1} parent=1 // loop_header_branch
      %20 = sbr.rel (%p18) target = $region8
    $region5: #{tpu_custom_call.1} parent=1 // loop_body
      %s22 = ssub.s32 %s17, 1
      %s23 = ssub.s32 %s17, 2
      %s24 = sadd.s32 %s17, 1
      %s25 = ssub.s32 %s17, %s24
      %p26 = scmp.eq.s32.totalorder %s25, 0
      %s28 = sadd.s32 %s27, 1
      %s29 = scalar_select %p26, %s27, %s28
      %p32 = pneg %p26
      %p33 = scmp.eq.s32.totalorder %s17, 1
      %p34 = por %p32, %p33
      %p35 = scmp.ne.s32.totalorder %s27, %s30
      %p36 = scmp.eq.s32.totalorder %s17, 0
      %p37 = por %p35, %p36
      %p38 = scmp.ne.s32.totalorder %s27, %s30
      %p39 = scmp.eq.s32.totalorder %s22, 1
      %p40 = por %p38, %p39
      %p41 = scmp.ne.s32.totalorder %s30, %s31
      %p42 = scmp.eq.s32.totalorder %s22, 0
      %p43 = por %p41, %p42
      %p44 = scmp.ne.s32.totalorder %s30, %s31
      %p45 = scmp.eq.s32.totalorder %s23, 1
      %p46 = por %p44, %p45
      %p48 = scmp.ne.s32.totalorder %s31, %s47
      %p49 = scmp.eq.s32.totalorder %s23, 0
      %p50 = por %p48, %p49
      %s52 = sadd.s32 %s51, 1
      %p55 = scmp.eq.s32.totalorder %s17, 1
      %p56 = scmp.ne.s32.totalorder %s51, %s53
      %p57 = scmp.eq.s32.totalorder %s17, 0
      %p58 = por %p56, %p57
      %p59 = scmp.ne.s32.totalorder %s51, %s53
      %p60 = scmp.eq.s32.totalorder %s22, 1
      %p61 = por %p59, %p60
      %p62 = scmp.ne.s32.totalorder %s53, %s54
      %p63 = scmp.eq.s32.totalorder %s22, 0
      %p64 = por %p62, %p63
      %p65 = scmp.ne.s32.totalorder %s53, %s54
      %p66 = scmp.eq.s32.totalorder %s23, 1
      %p67 = por %p65, %p66
      %p69 = scmp.ne.s32.totalorder %s54, %s68
      %p70 = scmp.eq.s32.totalorder %s23, 0
      %p71 = por %p69, %p70
      %s73 = sadd.s32 %s72, 1
      %p76 = scmp.eq.s32.totalorder %s17, 1
      %p77 = scmp.ne.s32.totalorder %s72, %s74
      %p78 = scmp.eq.s32.totalorder %s17, 0
      %p79 = por %p77, %p78
      %p80 = scmp.ne.s32.totalorder %s72, %s74
      %p81 = scmp.eq.s32.totalorder %s22, 1
      %p82 = por %p80, %p81
      %p83 = scmp.ne.s32.totalorder %s74, %s75
      %p84 = scmp.eq.s32.totalorder %s22, 0
      %p85 = por %p83, %p84
      %p86 = scmp.ne.s32.totalorder %s74, %s75
      %p87 = scmp.eq.s32.totalorder %s23, 1
      %p88 = por %p86, %p87
      %p90 = scmp.ne.s32.totalorder %s75, %s89
      %p91 = scmp.eq.s32.totalorder %s23, 0
      %p92 = por %p90, %p91
      %s94 = sadd.s32 %s93, 1
      %p97 = scmp.eq.s32.totalorder %s17, 1
      %p98 = scmp.ne.s32.totalorder %s93, %s95
      %p99 = scmp.eq.s32.totalorder %s17, 0
      %p100 = por %p98, %p99
      %p101 = scmp.ne.s32.totalorder %s93, %s95
      %p102 = scmp.eq.s32.totalorder %s22, 1
      %p103 = por %p101, %p102
      %p104 = scmp.ne.s32.totalorder %s95, %s96
      %p105 = scmp.eq.s32.totalorder %s22, 0
      %p106 = por %p104, %p105
      %p107 = scmp.ne.s32.totalorder %s95, %s96
      %p108 = scmp.eq.s32.totalorder %s23, 1
      %p109 = por %p107, %p108
      %p111 = scmp.ne.s32.totalorder %s96, %s110
      %p112 = scmp.eq.s32.totalorder %s23, 0
      %p113 = por %p111, %p112
      %s115 = sadd.s32 %s114, 1
      %p118 = scmp.eq.s32.totalorder %s17, 1
      %p119 = scmp.ne.s32.totalorder %s114, %s116
      %p120 = scmp.eq.s32.totalorder %s17, 0
      %p121 = por %p119, %p120
      %p122 = scmp.ne.s32.totalorder %s114, %s116
      %p123 = scmp.eq.s32.totalorder %s22, 1
      %p124 = por %p122, %p123
      %p125 = scmp.ne.s32.totalorder %s116, %s117
      %p126 = scmp.eq.s32.totalorder %s22, 0
      %p127 = por %p125, %p126
      %p128 = scmp.ne.s32.totalorder %s116, %s117
      %p129 = scmp.eq.s32.totalorder %s23, 1
      %p130 = por %p128, %p129
      %p132 = scmp.ne.s32.totalorder %s117, %s131
      %p133 = scmp.eq.s32.totalorder %s23, 0
      %p134 = por %p132, %p133
      %s135 = ssub.s32 %s17, %s24
      %p136 = scmp.eq.s32.totalorder %s135, 0
      %s138 = sadd.s32 %s137, 1
      %s139 = scalar_select %p136, %s137, %s138
      %p142 = pneg %p136
      %p143 = scmp.eq.s32.totalorder %s17, 1
      %p144 = por %p142, %p143
      %p145 = scmp.ne.s32.totalorder %s137, %s140
      %p146 = scmp.eq.s32.totalorder %s17, 0
      %p147 = por %p145, %p146
      %p148 = scmp.ne.s32.totalorder %s137, %s140
      %p149 = scmp.eq.s32.totalorder %s22, 1
      %p150 = por %p148, %p149
      %p151 = scmp.ne.s32.totalorder %s140, %s141
      %p152 = scmp.eq.s32.totalorder %s22, 0
      %p153 = por %p151, %p152
      %p154 = scmp.ne.s32.totalorder %s140, %s141
      %p155 = scmp.eq.s32.totalorder %s23, 1
      %p156 = por %p154, %p155
      %p158 = scmp.ne.s32.totalorder %s141, %s157
      %p159 = scmp.eq.s32.totalorder %s23, 0
      %p160 = por %p158, %p159
      %p161 = scmp.le.s32.totalorder 1, %s17
      %p162 = scmp.lt.s32.totalorder %s17, 3
      %p163 = pnand %p161, %p162
      %p164 = pneg %p163
      // Predicated region
      $region9: #{tpu_custom_call.1} parent=5 // pred_check
        _
      $region10: #{tpu_custom_call.1} parent=5 // pred_check_branch
        %166 = sbr.rel (%p163) target = $region12
      $region11: #{tpu_custom_call.1} parent=5 // pred_region
        %s167 = ssub.s32 %s17, 1
        // Predicated region
        $region13: #{tpu_custom_call.1} parent=11 // pred_check
          %p168 = pneg %p64
        $region14: #{tpu_custom_call.1} parent=11 // pred_check_branch
          %170 = sbr.rel (%p168) target = $region16
        $region15: #{tpu_custom_call.1} parent=11 // pred_region
          _
        $region16: #{tpu_custom_call.1} parent=11 // pred_fallthru
          _
        // Predicated region
        $region17: #{tpu_custom_call.1} parent=11 // pred_check
          %p171 = pneg %p85
        $region18: #{tpu_custom_call.1} parent=11 // pred_check_branch
          %173 = sbr.rel (%p171) target = $region20
        $region19: #{tpu_custom_call.1} parent=11 // pred_region
          _
        $region20: #{tpu_custom_call.1} parent=11 // pred_fallthru
          _
        // Predicated region
        $region21: #{tpu_custom_call.1} parent=11 // pred_check
          %p174 = pneg %p106
        $region22: #{tpu_custom_call.1} parent=11 // pred_check_branch
          %176 = sbr.rel (%p174) target = $region24
        $region23: #{tpu_custom_call.1} parent=11 // pred_region
          _
        $region24: #{tpu_custom_call.1} parent=11 // pred_fallthru
          _
        // Predicated region
        $region25: #{tpu_custom_call.1} parent=11 // pred_check
          %p177 = pneg %p127
        $region26: #{tpu_custom_call.1} parent=11 // pred_check_branch
          %179 = sbr.rel (%p177) target = $region28
        $region27: #{tpu_custom_call.1} parent=11 // pred_region
          _
        $region28: #{tpu_custom_call.1} parent=11 // pred_fallthru
          _
      $region12: #{tpu_custom_call.1} parent=5 // pred_fallthru
        _
      %p180 = scmp.lt.s32.totalorder %s17, 2
      // Predicated region
      $region29: #{tpu_custom_call.1} parent=5 // pred_check
        %p181 = pneg %p180
      $region30: #{tpu_custom_call.1} parent=5 // pred_check_branch
        %183 = sbr.rel (%p181) target = $region32
      $region31: #{tpu_custom_call.1} parent=5 // pred_region
        // Predicated region
        $region33: #{tpu_custom_call.1} parent=31 // pred_check
          %p184 = pneg %p37
        $region34: #{tpu_custom_call.1} parent=31 // pred_check_branch
          %186 = sbr.rel (%p184) target = $region36
        $region35: #{tpu_custom_call.1} parent=31 // pred_region
          %s187 = sand.u32 %s27, 1
          %s188 = scalar_lea.sflag [#allocation3], %s187
          %s189 = sand.u32 %s27, 1
          %s190 = smul.addr %s189, 24
          %s191 = scalar_lea.vmem [#allocation2], %s190
          %s192 = smul.u32 2, %s17
          %s194 = ssub.s32 384, 384
          %195 = vsyncadd %s188, %s194
          %s196 = smul.addr %s192, 64
          %s197 = scalar_lea.hbm %s0, %s196
          %s198 = sshll.u32 %s191, 4
          %s199 = int_to_ptr.vmem [resolvable:$true] %s198
          %204 = dma.hbm_to_vmem [thread:$0]  %s197, 384, %s199, %s188, 256, 128, 8
        $region36: #{tpu_custom_call.1} parent=31 // pred_fallthru
          _
      $region32: #{tpu_custom_call.1} parent=5 // pred_fallthru
        _
      %p205 = scmp.le.s32.totalorder 1, %s17
      %p206 = scmp.lt.s32.totalorder %s17, 3
      %p207 = pnand %p205, %p206
      %p208 = pneg %p207
      // Predicated region
      $region37: #{tpu_custom_call.1} parent=5 // pred_check
        _
      $region38: #{tpu_custom_call.1} parent=5 // pred_check_branch
        %210 = sbr.rel (%p207) target = $region40
      $region39: #{tpu_custom_call.1} parent=5 // pred_region
        %s211 = ssub.s32 %s17, 1
        %s212 = sand.u32 %s30, 1
        %s213 = scalar_lea.sflag [#allocation3], %s212
        %s214 = sand.u32 %s30, 1
        %s215 = smul.addr %s214, 24
        %s216 = scalar_lea.vmem [#allocation2], %s215
        // Predicated region
        $region41: #{tpu_custom_call.1} parent=39 // pred_check
          %p217 = pneg %p43
        $region42: #{tpu_custom_call.1} parent=39 // pred_check_branch
          %219 = sbr.rel (%p217) target = $region44
        $region43: #{tpu_custom_call.1} parent=39 // pred_region
          %220 = dma.done %s213, 384
        $region44: #{tpu_custom_call.1} parent=39 // pred_fallthru
          _
        %s221 = sand.u32 %s30, 1
        %s222 = scalar_lea.sflag [#allocation3], %s221
        %s223 = sand.u32 %s30, 1
        %s224 = smul.addr %s223, 24
        %s225 = scalar_lea.vmem [#allocation2], %s224
        %p226 = pneg %p43
        %p227 = pneg %p40
        %p228 = pneg %p64
        %p229 = pneg %p61
        %p230 = pneg %p85
        %p231 = pneg %p82
        %p232 = pneg %p106
        %p233 = pneg %p103
        %p234 = pneg %p127
        %p235 = pneg %p124
        %p236 = pneg %p153
        %p237 = pneg %p150
        %s238 = sand.u32 %s140, 1
        %s239 = scalar_lea.sflag [#allocation4], %s238
        %s240 = sand.u32 %s140, 1
        %s241 = smul.addr %s240, 8
        %s242 = scalar_lea.vmem [#allocation5], %s241
        %s243 = smul.u32 2, %s22
        %s244 = smul.u32 2, %s22
        %v245 = vld [vmem:[%s216] sm:$0xff]
        %v246 = vld [vmem:[%s216 + $0x8] sm:$0xff]
        %v247 = vld [vmem:[%s216 + $0x10] sm:$0xff]
        %v248 = vunpack.c.l.bf16 %v245
        %v249 = vunpack.c.h.bf16 %v245
        %v250 = vunpack.c.l.bf16 %v246
        %v251 = vunpack.c.h.bf16 %v246
        %v252 = vunpack.c.l.bf16 %v247
        %v253 = vunpack.c.h.bf16 %v247
        %v254 = vld [vmem:[%s1] sm:$0xff]
        %v255 = vld [vmem:[%s1 + $0x8] sm:$0xff]
        %v256 = vld [vmem:[%s2] sm:$0xff]
        %v257 = vld [vmem:[%s2 + $0x8] sm:$0xff]
        %259 = vset.pattern.permute.xlu0 0
        %260 = vperm.xlu0 %259, %v256
        %v261 = vpop.permute.xlu0 %260
        %264 = vset.pattern.permute.xlu0 0
        %265 = vperm.xlu0 %264, %v257
        %v266 = vpop.permute.xlu0 %265
        %vm268 = vcmask 195584
        %v270 = vsel %vm268, %v254, 0
        %v273 = vsel %vm268, %v255, 0
        %275 = vmatprep.subr.mxu0 0.0
        %276 = vmatpush1.msra.mxu0 0.0
        %277 = vmatprep.subr.mxu0 0.0
        %278 = vmatpush1.msra.mxu0 0.0
        %279 = vmatprep.subr.mxu0 0.0
        %280 = vmatpush1.msra.mxu0 0.0
        %281 = vmatprep.subr.mxu0 0.0
        %282 = vmatpush1.msra.mxu0 0.0
        %283 = vmatprep.subr.mxu0 0.0
        %284 = vmatpush1.msra.mxu0 0.0
        %285 = vmatprep.subr.mxu0 0.0
        %286 = vmatpush1.msra.mxu0 0.0
        %287 = vmatprep.subr.mxu0 0.0
        %288 = vmatpush1.msra.mxu0 0.0
        %289 = vmatprep.subr.mxu0 0.0
        %290 = vmatpush1.msra.mxu0 0.0
        %291 = vmatprep.subr.mxu0 0.0
        %292 = vmatpush1.msra.mxu0 0.0
        %293 = vmatprep.subr.mxu0 0.0
        %294 = vmatpush1.msra.mxu0 0.0
        %295 = vmatprep.subr.mxu0 0.0
        %296 = vmatpush1.msra.mxu0 0.0
        %297 = vmatprep.subr.mxu0 0.0
        %298 = vmatpush1.msra.mxu0 0.0
        %299 = vmatprep.subr.mxu0 0.0
        %300 = vmatpush1.msra.mxu0 0.0
        %301 = vmatprep.subr.mxu0 %v253
        %302 = vmatpush1.msra.mxu0 %v252
        %303 = vmatprep.subr.mxu0 %v251
        %304 = vmatpush1.msra.mxu0 %v250
        %305 = vmatprep.subr.mxu0 %v249
        %306 = vmatpush1.msra.mxu0 %v248
        %307 = vmatprep.subr.mxu0 0.0
        %308 = vmatpush2.msra.mxu0 0.0
        %309 = vmatprep.subr.mxu0 0.0
        %310 = vmatpush2.msra.mxu0 0.0
        %311 = vmatprep.subr.mxu0 0.0
        %312 = vmatpush2.msra.mxu0 0.0
        %313 = vmatprep.subr.mxu0 0.0
        %314 = vmatpush2.msra.mxu0 0.0
        %315 = vmatprep.subr.mxu0 0.0
        %316 = vmatpush2.msra.mxu0 0.0
        %317 = vmatprep.subr.mxu0 0.0
        %318 = vmatpush2.msra.mxu0 0.0
        %319 = vmatprep.subr.mxu0 0.0
        %320 = vmatpush2.msra.mxu0 0.0
        %321 = vmatprep.subr.mxu0 0.0
        %322 = vmatpush2.msra.mxu0 0.0
        %323 = vmatprep.subr.mxu0 0.0
        %324 = vmatpush2.msra.mxu0 0.0
        %325 = vmatprep.subr.mxu0 0.0
        %326 = vmatpush2.msra.mxu0 0.0
        %327 = vmatprep.subr.mxu0 0.0
        %328 = vmatpush2.msra.mxu0 0.0
        %329 = vmatprep.subr.mxu0 0.0
        %330 = vmatpush2.msra.mxu0 0.0
        %331 = vmatprep.subr.mxu0 0.0
        %332 = vmatpush2.msra.mxu0 0.0
        %333 = vmatprep.subr.mxu0 0.0
        %334 = vmatpush2.msra.mxu0 0.0
        %335 = vmatprep.subr.mxu0 0.0
        %336 = vmatpush2.msra.mxu0 0.0
        %337 = vmatprep.subr.mxu0 0.0
        %338 = vmatpush2.msra.mxu0 0.0
        %339 = vmatprep.mubr.f32.mxu0 0.0
        %340 = vmatmul.mubr.f32.gmra.mxu0 %v270
        %v341 = vpop.f32.mrf.mxu0
        %v342 = vadd.f32 %v261, %v341
        %v343 = vpop.f32.mrf.mxu0
        %v344 = vadd.f32 %v261, %v343
        %345 = vmatprep.mubr.f32.mxu0 0.0
        %346 = vmatmul.mubr.f32.gmra.mxu0 %v273
        %v347 = vpop.f32.mrf.mxu0
        %v348 = vadd.f32 %v266, %v347
        %v349 = vpop.f32.mrf.mxu0
        %v350 = vadd.f32 %v266, %v349
        %351 = vdwg.mxu0
        %v352 = vmax.f32 %v342, 0.0
        %v353 = vmax.f32 %v344, 0.0
        %v354 = vmax.f32 %v348, 0.0
        %v355 = vmax.f32 %v350, 0.0
        %v356 = vld [vmem:[%s3] sm:$0xf]
        %v357 = vld [vmem:[%s4] sm:$0xf]
        %359 = vset.pattern.permute.xlu0 0
        %360 = vperm.xlu0 %359, %v357
        %v361 = vpop.permute.xlu0 %360
        %vm363 = vcmask 130048
        %v365 = vsel %vm363, %v356, 0
        %367 = vmatprep.subr.mxu0 0.0
        %368 = vmatpush1.msra.mxu0 0.0
        %369 = vmatprep.subr.mxu0 0.0
        %370 = vmatpush1.msra.mxu0 0.0
        %371 = vmatprep.subr.mxu0 0.0
        %372 = vmatpush1.msra.mxu0 0.0
        %373 = vmatprep.subr.mxu0 0.0
        %374 = vmatpush1.msra.mxu0 0.0
        %375 = vmatprep.subr.mxu0 0.0
        %376 = vmatpush1.msra.mxu0 0.0
        %377 = vmatprep.subr.mxu0 0.0
        %378 = vmatpush1.msra.mxu0 0.0
        %379 = vmatprep.subr.mxu0 0.0
        %380 = vmatpush1.msra.mxu0 0.0
        %381 = vmatprep.subr.mxu0 0.0
        %382 = vmatpush1.msra.mxu0 0.0
        %383 = vmatprep.subr.mxu0 0.0
        %384 = vmatpush1.msra.mxu0 0.0
        %385 = vmatprep.subr.mxu0 0.0
        %386 = vmatpush1.msra.mxu0 0.0
        %387 = vmatprep.subr.mxu0 0.0
        %388 = vmatpush1.msra.mxu0 0.0
        %389 = vmatprep.subr.mxu0 0.0
        %390 = vmatpush1.msra.mxu0 0.0
        %391 = vmatprep.subr.mxu0 0.0
        %392 = vmatpush1.msra.mxu0 0.0
        %393 = vmatprep.subr.mxu0 0.0
        %394 = vmatpush1.msra.mxu0 0.0
        %395 = vmatprep.subr.mxu0 %v355
        %396 = vmatpush1.msra.mxu0 %v354
        %397 = vmatprep.subr.mxu0 %v353
        %398 = vmatpush1.msra.mxu0 %v352
        %399 = vmatprep.subr.mxu0 0.0
        %400 = vmatpush2.msra.mxu0 0.0
        %401 = vmatprep.subr.mxu0 0.0
        %402 = vmatpush2.msra.mxu0 0.0
        %403 = vmatprep.subr.mxu0 0.0
        %404 = vmatpush2.msra.mxu0 0.0
        %405 = vmatprep.subr.mxu0 0.0
        %406 = vmatpush2.msra.mxu0 0.0
        %407 = vmatprep.subr.mxu0 0.0
        %408 = vmatpush2.msra.mxu0 0.0
        %409 = vmatprep.subr.mxu0 0.0
        %410 = vmatpush2.msra.mxu0 0.0
        %411 = vmatprep.subr.mxu0 0.0
        %412 = vmatpush2.msra.mxu0 0.0
        %413 = vmatprep.subr.mxu0 0.0
        %414 = vmatpush2.msra.mxu0 0.0
        %415 = vmatprep.subr.mxu0 0.0
        %416 = vmatpush2.msra.mxu0 0.0
        %417 = vmatprep.subr.mxu0 0.0
        %418 = vmatpush2.msra.mxu0 0.0
        %419 = vmatprep.subr.mxu0 0.0
        %420 = vmatpush2.msra.mxu0 0.0
        %421 = vmatprep.subr.mxu0 0.0
        %422 = vmatpush2.msra.mxu0 0.0
        %423 = vmatprep.subr.mxu0 0.0
        %424 = vmatpush2.msra.mxu0 0.0
        %425 = vmatprep.subr.mxu0 0.0
        %426 = vmatpush2.msra.mxu0 0.0
        %427 = vmatprep.subr.mxu0 0.0
        %428 = vmatpush2.msra.mxu0 0.0
        %429 = vmatprep.subr.mxu0 0.0
        %430 = vmatpush2.msra.mxu0 0.0
        %431 = vmatprep.mubr.f32.mxu0 0.0
        %432 = vmatmul.mubr.f32.gmra.mxu0 %v365
        %v433 = vpop.f32.mrf.mxu0
        %v434 = vadd.f32 %v361, %v433
        %v435 = vpop.f32.mrf.mxu0
        %v436 = vadd.f32 %v361, %v435
        %437 = vdwg.mxu0
        %v438 = vmax.f32 %v434, 0.0
        %v439 = vmax.f32 %v436, 0.0
        %v440 = vadd.f32 %v438, %v252
        %v441 = vadd.f32 %v439, %v253
        %v442 = vmax.f32 %v440, 0.0
        %v443 = vmax.f32 %v441, 0.0
        %v446 = vcombine.low %v442, %v443
        %448 = vst [vmem:[%s242] sm:$0xff] %v446
        %s449 = sand.u32 %s140, 1
        %s450 = scalar_lea.sflag [#allocation4], %s449
        %s451 = sand.u32 %s140, 1
        %s452 = smul.addr %s451, 8
        %s453 = scalar_lea.vmem [#allocation5], %s452
        // Predicated region
        $region45: #{tpu_custom_call.1} parent=39 // pred_check
          %p454 = pneg %p150
        $region46: #{tpu_custom_call.1} parent=39 // pred_check_branch
          %456 = sbr.rel (%p454) target = $region48
        $region47: #{tpu_custom_call.1} parent=39 // pred_region
          %s457 = smul.u32 2, %s22
          %s459 = ssub.s32 128, 128
          %460 = vsyncadd %s450, %s459
          %s461 = smul.addr %s457, 64
          %s462 = scalar_lea.hbm %s5, %s461
          %s464 = sshll.u32 %s453, 4
          %s465 = int_to_ptr.vmem [resolvable:$true] %s464
          %467 = dma.vmem_to_hbm [thread:$0]  %s465, 128, %s462, %s450
        $region48: #{tpu_custom_call.1} parent=39 // pred_fallthru
          _
      $region40: #{tpu_custom_call.1} parent=5 // pred_fallthru
        _
      %p468 = scmp.le.s32.totalorder 2, %s17
      // Predicated region
      $region49: #{tpu_custom_call.1} parent=5 // pred_check
        %p469 = pneg %p468
      $region50: #{tpu_custom_call.1} parent=5 // pred_check_branch
        %471 = sbr.rel (%p469) target = $region52
      $region51: #{tpu_custom_call.1} parent=5 // pred_region
        %s472 = ssub.s32 %s17, 2
        // Predicated region
        $region53: #{tpu_custom_call.1} parent=51 // pred_check
          %p473 = pneg %p156
        $region54: #{tpu_custom_call.1} parent=51 // pred_check_branch
          %475 = sbr.rel (%p473) target = $region56
        $region55: #{tpu_custom_call.1} parent=51 // pred_region
          %s476 = sand.u32 %s141, 1
          %s477 = scalar_lea.sflag [#allocation4], %s476
          %s478 = sand.u32 %s141, 1
          %s479 = smul.addr %s478, 8
          %s480 = scalar_lea.vmem [#allocation5], %s479
          %481 = dma.done %s477, 128
        $region56: #{tpu_custom_call.1} parent=51 // pred_fallthru
          _
      $region52: #{tpu_custom_call.1} parent=5 // pred_fallthru
        _
    $region6: #{tpu_custom_call.1} parent=1 // loop_footer
      %s21 = sadd.s32 1, %s17
    $region7: #{tpu_custom_call.1} parent=1 // loop_footer_branch
      %16 = sbr.rel target = $region3
    $region8: #{tpu_custom_call.1} parent=1 // loop_exit
      _
    %482 = vsyncpa [#allocation3], 1
    %s483 = scalar_lea.sflag [#allocation3], 1
    %484 = vsyncpa %s483, 1
    %485 = vsyncpa [#allocation4], 1
    %s486 = scalar_lea.sflag [#allocation4], 1
    %487 = vsyncpa %s486, 1

</llo_original>
